<compile_context>
chip_gen: v7x
topology: tpu7x:2x2x1
jax: 0.10.0
libtpu: 0.0.40
codegen_flags: <defaults>
</compile_context>

<pallas_src>
import math
from dataclasses import dataclass
from typing import Sequence

import jax
import jax.numpy as jnp
from jax.experimental import pallas as pl
from jax.experimental.pallas import tpu as pltpu


# ---------------------------------------------------------------------------
# Parameter container (mirrors the PyTorch dataclass)
# ---------------------------------------------------------------------------
@dataclass
class AugmentationParameter:
    domain: Sequence[float]
    name: str
    current_value_idx: int = None
    prob: float = 0.2
    enabled: bool = True

    @property
    def magnitude(self):
        return self.domain[self.current_value_idx]


# ---------------------------------------------------------------------------
# Layout selection (trace-time, shape/dtype static under jit)
# ---------------------------------------------------------------------------
_LANE_CANDIDATES = (2048, 1024, 512, 256, 128)
_TARGET_BLOCK_BYTES = 8 * 1024 * 1024      # ~8 MiB tiles (dtype-independent)
_MAX_VMEM_LIMIT = 56 * 1024 * 1024         # stays inside v7x's 64 MiB VMEM


def _choose_layout(n: int, itemsize: int):
    """Pick a lane-dense 2D layout + block size for a flat n-element tensor."""
    # dtype-aware sublane packing factor (sub-32-bit dtypes pack along sublanes)
    sub_mult = {4: 8, 2: 16, 1: 32}.get(itemsize, 8)

    # Prefer the widest lane count that divides n exactly -> no pad, no slice.
    lane = None
    for cand in _LANE_CANDIDATES:
        if n % cand == 0:
            lane = cand
            break
    pad = 0
    if lane is None:
        # Rare fallback: pad the (< 128-element) tail only.
        lane = 128
        pad = (-n) % lane
    rows = (n + pad) // lane

    # Block rows: ~8 MiB per tile, sublane-aligned, and capped near rows/2 so
    # large tensors always give >= 2 grid steps (v7x megacore needs >= 2).
    br = max(sub_mult, (_TARGET_BLOCK_BYTES // (lane * itemsize)) // sub_mult * sub_mult)
    half_rows = pl.cdiv(pl.cdiv(rows, 2), sub_mult) * sub_mult
    br = max(sub_mult, min(br, half_rows))
    if br >= rows:
        br = rows                     # single block == full dim (always legal)

    block_bytes = br * lane * itemsize
    vmem_limit = min(_MAX_VMEM_LIMIT, max(16 * 1024 * 1024, 4 * block_bytes + 4 * 1024 * 1024))
    return lane, rows, pad, br, vmem_limit


# ---------------------------------------------------------------------------
# Fused affine augmentation: y = scale * x + offset  (single Pallas pass)
# ---------------------------------------------------------------------------
def _affine_kernel(params_ref, x_ref, o_ref):
    # params_ref lives in SMEM: [scale, offset] as f32 (runtime values, so new
    # magnitudes do not trigger recompiles).
    s = params_ref[0]
    b = params_ref[1]
    # Compute in f32 (safe on v5e, which lacks a bf16 VPU path); store in the
    # output dtype.  The kernel is DMA-bound so the casts are free filler.
    xv = x_ref[...].astype(jnp.float32)
    o_ref[...] = (xv * s + b).astype(o_ref.dtype)


@jax.jit
def _fused_affine_augment(x, params):
    """Apply y = params[0] * x + params[1] in one lane-dense Pallas pass."""
    orig_shape = x.shape
    dtype = x.dtype
    n = math.prod(orig_shape)
    itemsize = jnp.dtype(dtype).itemsize

    lane, rows, pad, block_rows, vmem_limit = _choose_layout(n, itemsize)

    xf = jnp.ravel(x)
    if pad:
        # Fallback only when n is not a multiple of 128 (adds one extra pass).
        xf = jnp.pad(xf, (0, pad))
    x2 = xf.reshape(rows, lane)

    grid = (pl.cdiv(rows, block_rows),)   # partial final block masked by Pallas

    out2 = pl.pallas_call(
        _affine_kernel,
        out_shape=jax.ShapeDtypeStruct((rows, lane), dtype),
        grid=grid,
        in_specs=[
            pl.BlockSpec(memory_space=pltpu.MemorySpace.SMEM),       # scalars
            pl.BlockSpec((block_rows, lane), lambda i: (i, 0)),      # x tile
        ],
        out_specs=pl.BlockSpec((block_rows, lane), lambda i: (i, 0)),
        compiler_params=pltpu.CompilerParams(
            dimension_semantics=("parallel",),
            vmem_limit_bytes=vmem_limit,
        ),
    )(params, x2)

    if pad:
        return out2.reshape(-1)[:n].reshape(orig_shape)
    return out2.reshape(orig_shape)


# ---------------------------------------------------------------------------
# Concrete AugmentModule (JAX/Pallas version)
# ---------------------------------------------------------------------------
class AugmentModule:
    # TODO(synk): the PyTorch base class is abstract; this concrete
    # instantiation picks deterministic scale/offset augmentations so the
    # forward loop semantics (fold x through enabled params, passthrough
    # otherwise) are exercised.  Per-parameter `prob` is metadata only (the
    # base forward applies every enabled param unconditionally).

    def __init__(self):
        self.augment_params = self.default_params

    @property
    def default_params(self) -> Sequence[AugmentationParameter]:
        return [
            AugmentationParameter([0.5, 0.75, 1.0, 1.25, 1.5], "scale",
                                  current_value_idx=3, prob=0.2, enabled=True),
            AugmentationParameter([-0.2, -0.1, 0.0, 0.1, 0.2], "offset",
                                  current_value_idx=4, prob=0.2, enabled=True),
            AugmentationParameter([0.01, 0.05, 0.1], "noise",
                                  current_value_idx=0, prob=0.2, enabled=False),
        ]

    def augment(self, param: AugmentationParameter, x, **kwargs):
        # Single-parameter application (kept for API parity with PyTorch).
        if param.name == "scale":
            p = jnp.array([float(param.magnitude), 0.0], dtype=jnp.float32)
            return _fused_affine_augment(x, p)
        if param.name == "offset":
            p = jnp.array([1.0, float(param.magnitude)], dtype=jnp.float32)
            return _fused_affine_augment(x, p)
        return x  # unknown augmentation -> identity

    def passthrough(self, x, **kwargs):
        return x

    def forward(self, x, **kwargs):
        # Fold x through every parameter, exactly as the PyTorch forward does,
        # but compose the (purely affine) enabled augmentations Python-side so
        # the tensor is streamed through HBM exactly once.
        a, b = 1.0, 0.0
        pending = False
        for param in self.augment_params:
            if not param.enabled:
                x = self.passthrough(x, **kwargs)
                continue
            if param.name == "scale":
                m = float(param.magnitude)
                a, b = a * m, b * m
                pending = True
            elif param.name == "offset":
                b = b + float(param.magnitude)
                pending = True
            else:
                # TODO(synk): a non-affine enabled augmentation would need to
                # flush the pending affine pass first; none are defined here.
                x = self.passthrough(x, **kwargs)
        if pending:
            params = jnp.array([a, b], dtype=jnp.float32)  # runtime scalars
            x = _fused_affine_augment(x, params)
        return x

    __call__ = forward


# ---------------------------------------------------------------------------
# Demo / smoke test
# ---------------------------------------------------------------------------
if __name__ == "__main__":
    key = jax.random.PRNGKey(0)
    B, C, T, F = 2, 4, 16, 16
    x = jax.random.normal(key, (B, C, T, F), dtype=jnp.float32)

    module = AugmentModule()
    y = module(x)
    y = jax.block_until_ready(y)

    # reference: scale by 1.25 then add 0.2 (same fold as the PyTorch forward)
    y_ref = x * 1.25 + 0.2
    assert y.shape == x.shape and y.dtype == x.dtype
    assert jnp.allclose(y, y_ref, atol=1e-6), "mismatch vs reference"

    print("KERNEL_OK")
</pallas_src>

<mosaic_0001>
module attributes {stable_mosaic.version = 11 : i64} {
  func.func @_affine_kernel(%arg0: i32, %arg1: memref<2xf32, #tpu.memory_space<smem>>, %arg2: memref<1x2048xf32, #tpu.memory_space<vmem>>, %arg3: memref<1x2048xf32, #tpu.memory_space<vmem>>) attributes {dimension_semantics = [#tpu.dimension_semantics<parallel>], iteration_bounds = array<i64: 1>, scalar_prefetch = 0 : i64, scratch_operands = 0 : i64, tpu.core_type = #tpu.core_type<tc>, window_params = [{transform_indices = @transform_0, window_bounds = array<i64: 2>}, {transform_indices = @transform_1, window_bounds = array<i64: 1, 2048>}, {transform_indices = @transform_2, window_bounds = array<i64: 1, 2048>}]} {
    %c0 = arith.constant 0 : index
    %0 = memref.load %arg1[%c0] : memref<2xf32, #tpu.memory_space<smem>>
    %c1 = arith.constant 1 : index
    %1 = memref.load %arg1[%c1] : memref<2xf32, #tpu.memory_space<smem>>
    %c0_0 = arith.constant 0 : index
    %c0_1 = arith.constant 0 : index
    %2 = vector.load %arg2[%c0_0, %c0_1] : memref<1x2048xf32, #tpu.memory_space<vmem>>, vector<1x2048xf32>
    %3 = vector.broadcast %0 : f32 to vector<1x2048xf32>
    %4 = arith.mulf %2, %3 : vector<1x2048xf32>
    %5 = vector.broadcast %1 : f32 to vector<1x2048xf32>
    %6 = arith.addf %4, %5 : vector<1x2048xf32>
    %c0_2 = arith.constant 0 : index
    %c0_3 = arith.constant 0 : index
    %7 = vector.load %arg3[%c0_2, %c0_3] : memref<1x2048xf32, #tpu.memory_space<vmem>>, vector<1x2048xf32>
    tpu.vector_store %arg3[%c0_2, %c0_3], %6 {strides = array<i32>} : memref<1x2048xf32, #tpu.memory_space<vmem>>, vector<1x2048xf32>,
    return
  }
  func.func @transform_0(%arg0: i32) -> i32 {
    %c0_i32 = arith.constant 0 : i32
    %c0_i32_0 = arith.constant 0 : i32
    return %c0_i32 : i32
  }
  func.func @transform_1(%arg0: i32) -> (i32, i32) {
    %c0_i32 = arith.constant 0 : i32
    %c0_i32_0 = arith.constant 0 : i32
    return %arg0, %c0_i32 : i32, i32
  }
  func.func @transform_2(%arg0: i32) -> (i32, i32) {
    %c0_i32 = arith.constant 0 : i32
    %c0_i32_0 = arith.constant 0 : i32
    return %arg0, %c0_i32 : i32, i32
  }
}

</mosaic_0001>

<llo_original>
// kernel: _fused_affine_augment.1
$region0: #{_fused_affine_augment.1}
  #allocation0 [shape = 'u32[]', space=smem, size = 0x4, offset = 0x4, fixed_abs, tag = 'smem constant byte address 0x4 - core index']
  #allocation1 [shape = 'u32[144,128]{1,0:T(1,128)}', space=vmem, size = 0x12000, scoped, tag = 'internal scratch']
  %s0 = inlined_call_operand.vmem [shape: f32[2], index: 0, kind: input, shape index: {}]
  %s1 = inlined_call_operand.vmem [shape: f32[1,2048], index: 1, kind: input, shape index: {}]
  %s2 = inlined_call_operand.vmem [shape: f32[1,2048], index: 2, kind: output, shape index: {}]
  %s3 = sld [smem:[#allocation0]]
  $region22: #{_fused_affine_augment.1} parent=0
    _
  %s5 = ssub.s32 1, %s3
  %s6 = scalar_select 0, %s5, %s3
  $region1: #{_fused_affine_augment.1} parent=0
    #allocation2 [shape = 'u8[512]{0}', space=smem, size = 0x200, scoped, tag = 'input window, operand 0, single buffered']
    #allocation3 [shape = 's32[1]{0}', space=sflag, size = 0x4, scoped, tag = 'scoped memory for _fused_affine_augment.1']
    %7 = vsyncpa [#allocation3], 0
    // Predicated region
    $region2: #{_fused_affine_augment.1} parent=1 // pred_check
      _
    $region3: #{_fused_affine_augment.1} parent=1 // pred_check_branch
      %9 = sbr.rel (0) target = $region5
    $region4: #{_fused_affine_augment.1} parent=1 // pred_region
      %s11 = ssub.s32 16, 16
      %12 = vsyncadd [#allocation3], %s11
      %s14 = sshll.u32 %s0, 4
      %s15 = int_to_ptr.vmem [resolvable:$true] %s14
      %17 = dma.vmem_to_smem %s15, 16, [#allocation2], [#allocation3]
    $region5: #{_fused_affine_augment.1} parent=1 // pred_fallthru
      _
    // Predicated region
    $region6: #{_fused_affine_augment.1} parent=1 // pred_check
      _
    $region7: #{_fused_affine_augment.1} parent=1 // pred_check_branch
      %19 = sbr.rel (0) target = $region9
    $region8: #{_fused_affine_augment.1} parent=1 // pred_region
      _
    $region9: #{_fused_affine_augment.1} parent=1 // pred_fallthru
      _
    // Predicated region
    $region10: #{_fused_affine_augment.1} parent=1 // pred_check
      _
    $region11: #{_fused_affine_augment.1} parent=1 // pred_check_branch
      %21 = sbr.rel (0) target = $region13
    $region12: #{_fused_affine_augment.1} parent=1 // pred_region
      %22 = dma.done [#allocation3], 16
    $region13: #{_fused_affine_augment.1} parent=1 // pred_fallthru
      _
    %23 = sfence
    %s24 = sld [smem:[#allocation2]]
    %s25 = sld [smem:[#allocation2 + $0x1]]
    %v26 = vld [vmem:[%s1] sm:$0xff]
    %v27 = vld [vmem:[%s1 + $0x8] sm:$0xff]
    %v28 = vstv %s24
    %v29 = vmul.f32 %v26, %v28
    %v30 = vmul.f32 %v27, %v28
    %v31 = vstv %s25
    %v32 = vadd.f32 %v29, %v31
    %v33 = vadd.f32 %v30, %v31
    %34 = vst [vmem:[%s2] sm:$0xff] %v32
    %35 = vst [vmem:[%s2 + $0x8] sm:$0xff] %v33
    // Predicated region
    $region14: #{_fused_affine_augment.1} parent=1 // pred_check
      _
    $region15: #{_fused_affine_augment.1} parent=1 // pred_check_branch
      %37 = sbr.rel (0) target = $region17
    $region16: #{_fused_affine_augment.1} parent=1 // pred_region
      _
    $region17: #{_fused_affine_augment.1} parent=1 // pred_fallthru
      _
    // Predicated region
    $region18: #{_fused_affine_augment.1} parent=1 // pred_check
      _
    $region19: #{_fused_affine_augment.1} parent=1 // pred_check_branch
      %39 = sbr.rel (0) target = $region21
    $region20: #{_fused_affine_augment.1} parent=1 // pred_region
      _
    $region21: #{_fused_affine_augment.1} parent=1 // pred_fallthru
      _
    %40 = vsyncpa [#allocation3], 1

</llo_original>
